<compile_context>
chip_gen: v7x
topology: tpu7x:2x2x1
jax: 0.10.0
libtpu: 0.0.40
codegen_flags: <defaults>
</compile_context>

<pallas_src>
from typing import NamedTuple

import jax
import jax.numpy as jnp
from jax.experimental import pallas as pl
from jax.experimental.pallas import tpu as pltpu


def _round_up(x: int, m: int) -> int:
    return ((x + m - 1) // m) * m


def _vmem_budget_bytes() -> int:
    """Per-core VMEM budget: physical capacity with ~15% headroom for Mosaic
    internal scratch / semaphores / pipeline second buffers."""
    cap = 64 << 20  # conservative fallback (v7x per-TC size)
    try:
        info = pltpu.get_tpu_info()
        for name in ("vmem_capacity_bytes", "vmem_size_bytes", "vmem_bytes"):
            val = getattr(info, name, None)
            if val:
                cap = int(val)
                break
    except Exception:
        pass
    return int(cap * 0.85)


_TM_MAX = 256                                  # token rows per tile (MXU-friendly)
_TN_CANDIDATES = (4096, 2048, 1024, 512, 256, 128)


def _choose_tn(embed_dim: int, vocab: int, out_dtype, budget: int) -> int:
    """Largest vocab tile (multiple of 128) whose working set fits the budget."""
    out_b = jnp.dtype(out_dtype).itemsize
    v128 = _round_up(vocab, 128)
    for tn in _TN_CANDIDATES:
        tn = min(tn, v128)
        need = (2 * tn * embed_dim * 2          # bf16 weight tile, double buffered
                + _TM_MAX * embed_dim * 4       # f32 fused-gather activation scratch
                + 2 * _TM_MAX * tn * out_b      # output tile, double buffered
                + 2 * tn * 4                    # bias tile
                + (2 << 20))                    # slack
        if need <= budget:
            return tn
    return 128


class LMHeadPlan(NamedTuple):
    vocab: int
    vocab_pad: int
    embed_dim: int
    tn: int
    out_dtype: object
    vmem_limit: int


def prepare_lm_decoder(embed_tokens, w_out=None, b_out=None, *,
                       out_dtype=jnp.bfloat16, compute_dtype=jnp.bfloat16):
    """One-time (per model, NOT per forward) parameter prep.

    * embedding table stays in its native dtype (gathered row-by-row by the
      kernel; cast to bf16 happens on-chip right before the MXU).
    * LM-head weight -> bf16, transposed to (D, V_pad) (native MXU layout) and
      padded to the vocab tile once, so the hot path never pads/casts/copies.
    * fairseq decoders usually tie output_projection.weight to embed_tokens and
      have no bias: pass w_out=None / b_out=None to express exactly that.
    """
    V, D = embed_tokens.shape
    if w_out is None:
        w_out = embed_tokens                        # weight tying
    if b_out is None:
        b_out = jnp.zeros((V,), jnp.float32)        # fairseq output proj. has no bias
    assert w_out.shape == (V, D), "output projection must be (vocab, embed_dim)"
    assert b_out.shape == (V,)

    budget = _vmem_budget_bytes()
    tn = _choose_tn(D, V, out_dtype, budget)
    V_pad = _round_up(V, tn)

    w_t = jnp.transpose(w_out.astype(compute_dtype))     # (D, V): MXU-native layout
    b = b_out.astype(jnp.float32).reshape(1, V)
    if V_pad != V:
        w_t = jnp.pad(w_t, ((0, 0), (0, V_pad - V)))
        b = jnp.pad(b, ((0, 0), (0, V_pad - V)))

    plan = LMHeadPlan(V, V_pad, D, tn, out_dtype, budget)
    return plan, embed_tokens, w_t, b


# ----------------------------------------------------------------------------
# Fused kernel: gather tm embedding rows (HBM -> VMEM, by token id), then one
# (tm, tn) logits tile = rows @ W_tile + bias_tile   (bf16 MXU, f32 accumulate)
# ----------------------------------------------------------------------------
def _fused_lm_kernel(tok_ref, emb_hbm, w_ref, b_ref, o_ref, x_vmem, sem):
    i = pl.program_id(1)                 # token-row tile index (global)
    tm = x_vmem.shape[0]
    base = i * tm

    # Fused extract_features: per-row DMA gather straight from the embedding
    # table in HBM (f32 rows -> clean full-word DMA regardless of row index).
    # TODO(synk): double-buffer the gather (prefetch row-tile i+1) and pack the
    # table to bf16/u32 pairs to halve the recurring gather traffic.
    @pl.loop(0, tm)
    def _start(r):
        tok = tok_ref[base + r]
        pltpu.make_async_copy(
            emb_hbm.at[pl.ds(tok, 1), :], x_vmem.at[pl.ds(r, 1), :], sem
        ).start()

    @pl.loop(0, tm)
    def _wait(r):
        # Same-shaped descriptor on the same semaphore -> waits one row copy.
        pltpu.make_async_copy(
            emb_hbm.at[pl.ds(0, 1), :], x_vmem.at[pl.ds(0, 1), :], sem
        ).wait()

    # output_layer: bf16 operands, f32 MXU accumulation, cast on store.
    lhs = x_vmem[...].astype(w_ref.dtype)
    acc = jnp.dot(lhs, w_ref[...], preferred_element_type=jnp.float32)
    o_ref[...] = (acc + b_ref[...]).astype(o_ref.dtype)


def lm_head_logits(src_tokens_flat, plan: LMHeadPlan, emb, w_t, b):
    """(M,) int32 token ids -> (M, vocab) logits via the fused Pallas kernel."""
    M = int(src_tokens_flat.shape[0])
    D, V, V_pad, tn = plan.embed_dim, plan.vocab, plan.vocab_pad, plan.tn

    tm = min(_TM_MAX, _round_up(M, 8))
    M_pad = _round_up(M, tm)
    tokens = src_tokens_flat.astype(jnp.int32)
    if M_pad != M:
        tokens = jnp.pad(tokens, (0, M_pad - M))      # padded rows gather token 0

    n_vocab_tiles = V_pad // tn
    n_row_tiles = M_pad // tm
    grid = (n_vocab_tiles, n_row_tiles)   # vocab outer: each weight tile fetched once

    emb_b = jnp.dtype(emb.dtype).itemsize
    out_b = jnp.dtype(plan.out_dtype).itemsize
    cost = pl.CostEstimate(
        flops=2 * M_pad * D * V_pad,
        transcendentals=0,
        bytes_accessed=(n_vocab_tiles * M_pad * D * emb_b   # activation re-gather / vocab tile
                        + V_pad * D * 2                     # bf16 weights, fetched once
                        + V_pad * 4                         # bias
                        + M_pad * V_pad * out_b),           # logits writeback
    )

    out = pl.pallas_call(
        _fused_lm_kernel,
        out_shape=jax.ShapeDtypeStruct((M_pad, V_pad), plan.out_dtype),
        grid_spec=pltpu.PrefetchScalarGridSpec(
            num_scalar_prefetch=1,                               # token ids -> SMEM
            grid=grid,
            in_specs=[
                pl.BlockSpec(memory_space=pl.ANY),               # embedding table (HBM)
                pl.BlockSpec((D, tn), lambda j, i, tok: (0, j)),  # weight tile
                pl.BlockSpec((1, tn), lambda j, i, tok: (0, j)),  # bias tile
            ],
            out_specs=pl.BlockSpec((tm, tn), lambda j, i, tok: (i, j)),
            scratch_shapes=[
                pltpu.VMEM((tm, D), emb.dtype),                  # gathered feature rows
                pltpu.SemaphoreType.DMA,                         # gather semaphore
            ],
        ),
        compiler_params=pltpu.CompilerParams(
            # Both axes are independent output tiles; on v7x the compiler splits
            # whichever parallel axis balances the 2 TensorCores best.
            dimension_semantics=("parallel", "parallel"),
            vmem_limit_bytes=int(plan.vmem_limit),
        ),
        cost_estimate=cost,
    )(tokens, emb, w_t, b)

    if M_pad != M or V_pad != V:
        out = out[:M, :V]
    return out


def fairseq_language_model_forward(src_tokens, plan, emb, w_t, b, *,
                                   return_features=False):
    """FairseqLanguageModel.forward: (B, T) token ids -> ((B, T, V) logits, extra)."""
    B, T = src_tokens.shape
    logits = lm_head_logits(src_tokens.reshape(-1), plan, emb, w_t, b)
    logits = logits.reshape(B, T, plan.vocab)
    # TODO(synk): a concrete fairseq decoder also returns attention / inner
    # states; this base-class-level forward has only embedding + LM head.
    extra = {"attn": [None]}
    if return_features:
        feats = jnp.take(emb, src_tokens.reshape(-1), axis=0)
        extra["inner_states"] = [feats.reshape(B, T, plan.embed_dim)]
    return logits, extra


if __name__ == "__main__":
    # Small, decoder-consistent shapes: batch=2, tgt_len=8, embed_dim=32, vocab=128
    B, T, D, V = 2, 8, 32, 128

    key = jax.random.PRNGKey(0)
    k_tok, k_emb, k_w, k_b = jax.random.split(key, 4)

    src_tokens = jax.random.randint(k_tok, (B, T), 0, V, dtype=jnp.int32)
    embed_tokens = jax.random.normal(k_emb, (V, D), jnp.float32) * 0.02
    w_out = jax.random.normal(k_w, (V, D), jnp.float32) * 0.02
    b_out = jax.random.normal(k_b, (V,), jnp.float32) * 0.01

    # One-time parameter prep (bf16 / transpose / pad happens here, not per call).
    plan, emb, w_t, b = prepare_lm_decoder(embed_tokens, w_out, b_out)

    logits, extra = fairseq_language_model_forward(src_tokens, plan, emb, w_t, b)
    logits = jax.block_until_ready(logits)

    # Reference with matching bf16-operand / f32-accumulate semantics.
    feats = jnp.take(embed_tokens, src_tokens.reshape(-1), axis=0)
    fr = feats.astype(jnp.bfloat16).astype(jnp.float32)
    wr = w_out.astype(jnp.bfloat16).astype(jnp.float32)
    ref = (fr @ wr.T + b_out).reshape(B, T, V)

    assert logits.shape == (B, T, V)
    err = float(jnp.max(jnp.abs(logits.astype(jnp.float32) - ref)))
    assert err < 1e-2, err

    # Ragged-shape path: non-multiple-of-tile vocab / token count, tied weights,
    # no bias (the usual fairseq decoder configuration).
    B2, T2, V2 = 2, 5, 100
    src2 = jax.random.randint(k_tok, (B2, T2), 0, V2, dtype=jnp.int32)
    emb2_f32 = jax.random.normal(k_emb, (V2, D), jnp.float32) * 0.02
    plan2, emb2, w_t2, b2 = prepare_lm_decoder(emb2_f32)      # tied, bias-free
    logits2, _ = fairseq_language_model_forward(src2, plan2, emb2, w_t2, b2)
    logits2 = jax.block_until_ready(logits2)

    f2 = jnp.take(emb2_f32, src2.reshape(-1), axis=0).astype(jnp.bfloat16).astype(jnp.float32)
    w2 = emb2_f32.astype(jnp.bfloat16).astype(jnp.float32)
    ref2 = (f2 @ w2.T).reshape(B2, T2, V2)

    assert logits2.shape == (B2, T2, V2)
    err2 = float(jnp.max(jnp.abs(logits2.astype(jnp.float32) - ref2)))
    assert err2 < 1e-2, err2

    print("KERNEL_OK")
</pallas_src>

<mosaic_0001>
module attributes {stable_mosaic.version = 11 : i64} {
  func.func @_fused_lm_kernel(%arg0: i32, %arg1: i32, %arg2: memref<16xi32, #tpu.memory_space<smem>>, %arg3: memref<128x32xf32, #tpu.memory_space<any>>, %arg4: memref<32x128xbf16, #tpu.memory_space<vmem>>, %arg5: memref<1x128xf32, #tpu.memory_space<vmem>>, %arg6: memref<16x128xbf16, #tpu.memory_space<vmem>>, %arg7: memref<16x32xf32, #tpu.memory_space<vmem>>, %arg8: memref<!tpu.dma_semaphore, #tpu.memory_space<semaphore_mem>>) attributes {dimension_semantics = [#tpu.dimension_semantics<parallel>, #tpu.dimension_semantics<parallel>], iteration_bounds = array<i64: 1, 1>, scalar_prefetch = 1 : i64, scratch_operands = 2 : i64, tpu.core_type = #tpu.core_type<tc>, window_params = [{}, {transform_indices = @transform_1, window_bounds = array<i64: 32, 128>}, {transform_indices = @transform_2, window_bounds = array<i64: 1, 128>}, {transform_indices = @transform_3, window_bounds = array<i64: 16, 128>}]} {
    %c16_i32 = arith.constant 16 : i32
    %0 = arith.muli %arg1, %c16_i32 : i32
    %c0_i32 = arith.constant 0 : i32
    %c16_i32_0 = arith.constant 16 : i32
    %1 = arith.addi %c0_i32, %c16_i32_0 : i32
    %c1_i32 = arith.constant 1 : i32
    scf.for %arg9 = %c0_i32 to %1 step %c1_i32  : i32 {
      %c1_i32_12 = arith.constant 1 : i32
      %12 = arith.muli %arg9, %c1_i32_12 : i32
      %c0_i32_13 = arith.constant 0 : i32
      %13 = arith.addi %c0_i32_13, %12 : i32
      %14 = arith.addi %0, %13 : i32
      %15 = arith.index_cast %14 : i32 to index
      %16 = memref.load %arg2[%15] : memref<16xi32, #tpu.memory_space<smem>>
      %c0_i32_14 = arith.constant 0 : i32
      %17 = tpu.memref_slice %arg3[%16, %c0_i32_14] : memref<128x32xf32, #tpu.memory_space<any>> -> memref<1x32xf32, #tpu.memory_space<any>>
      %c0_i32_15 = arith.constant 0 : i32
      %18 = tpu.memref_slice %arg7[%13, %c0_i32_15] : memref<16x32xf32, #tpu.memory_space<vmem>> -> memref<1x32xf32, #tpu.memory_space<vmem>>
      tpu.enqueue_dma source(%17 : memref<1x32xf32, #tpu.memory_space<any>>) target(%18 : memref<1x32xf32, #tpu.memory_space<vmem>>) target_semaphore(%arg8 : memref<!tpu.dma_semaphore, #tpu.memory_space<semaphore_mem>>)
    }
    %c16_i32_1 = arith.constant 16 : i32
    %c0_i32_2 = arith.constant 0 : i32
    %c16_i32_3 = arith.constant 16 : i32
    %2 = arith.addi %c0_i32_2, %c16_i32_3 : i32
    %c1_i32_4 = arith.constant 1 : i32
    scf.for %arg9 = %c0_i32_2 to %2 step %c1_i32_4  : i32 {
      %c0_i32_12 = arith.constant 0 : i32
      %c0_i32_13 = arith.constant 0 : i32
      %12 = tpu.memref_slice %arg3[%c0_i32_12, %c0_i32_13] : memref<128x32xf32, #tpu.memory_space<any>> -> memref<1x32xf32, #tpu.memory_space<any>>
      %c0_i32_14 = arith.constant 0 : i32
      %c0_i32_15 = arith.constant 0 : i32
      %13 = tpu.memref_slice %arg7[%c0_i32_14, %c0_i32_15] : memref<16x32xf32, #tpu.memory_space<vmem>> -> memref<1x32xf32, #tpu.memory_space<vmem>>
      tpu.wait_dma2 semaphore(%arg8 : memref<!tpu.dma_semaphore, #tpu.memory_space<semaphore_mem>>) src(%12 : memref<1x32xf32, #tpu.memory_space<any>>) dst(%13 : memref<1x32xf32, #tpu.memory_space<vmem>>)
    }
    %c0 = arith.constant 0 : index
    %c0_5 = arith.constant 0 : index
    %3 = vector.load %arg7[%c0, %c0_5] : memref<16x32xf32, #tpu.memory_space<vmem>>, vector<16x32xf32>
    %4 = arith.truncf %3 : vector<16x32xf32> to vector<16x32xbf16>
    %c0_6 = arith.constant 0 : index
    %c0_7 = arith.constant 0 : index
    %5 = vector.load %arg4[%c0_6, %c0_7] : memref<32x128xbf16, #tpu.memory_space<vmem>>, vector<32x128xbf16>
    %cst = arith.constant dense<0.000000e+00> : vector<16x128xf32>
    %6 = tpu.matmul %4, %5, %cst {dimension_numbers = #tpu.dot_dimension_numbers<[1], [0], [0], [1], [0, 0, 1, 1], [], []>} : vector<16x32xbf16>, vector<32x128xbf16>, vector<16x128xf32> -> vector<16x128xf32>
    %c0_8 = arith.constant 0 : index
    %c0_9 = arith.constant 0 : index
    %7 = vector.load %arg5[%c0_8, %c0_9] : memref<1x128xf32, #tpu.memory_space<vmem>>, vector<1x128xf32>
    %8 = vector.broadcast %7 : vector<1x128xf32> to vector<16x128xf32>
    %9 = arith.addf %6, %8 : vector<16x128xf32>
    %10 = arith.truncf %9 : vector<16x128xf32> to vector<16x128xbf16>
    %c0_10 = arith.constant 0 : index
    %c0_11 = arith.constant 0 : index
    %11 = vector.load %arg6[%c0_10, %c0_11] : memref<16x128xbf16, #tpu.memory_space<vmem>>, vector<16x128xbf16>
    tpu.vector_store %arg6[%c0_10, %c0_11], %10 {strides = array<i32>} : memref<16x128xbf16, #tpu.memory_space<vmem>>, vector<16x128xbf16>,
    return
  }
  func.func @transform_1(%arg0: i32, %arg1: i32, %arg2: memref<16xi32, #tpu.memory_space<smem>>) -> (i32, i32) {
    %c0_i32 = arith.constant 0 : i32
    %c0_i32_0 = arith.constant 0 : i32
    return %c0_i32, %arg0 : i32, i32
  }
  func.func @transform_2(%arg0: i32, %arg1: i32, %arg2: memref<16xi32, #tpu.memory_space<smem>>) -> (i32, i32) {
    %c0_i32 = arith.constant 0 : i32
    %c0_i32_0 = arith.constant 0 : i32
    return %c0_i32, %arg0 : i32, i32
  }
  func.func @transform_3(%arg0: i32, %arg1: i32, %arg2: memref<16xi32, #tpu.memory_space<smem>>) -> (i32, i32) {
    %c0_i32 = arith.constant 0 : i32
    return %arg1, %arg0 : i32, i32
  }
}

</mosaic_0001>

<llo_original>
// kernel: tpu_custom_call.1
$region0: #{tpu_custom_call.1}
  #allocation0 [shape = 'u32[]', space=smem, size = 0x4, offset = 0x4, fixed_abs, tag = 'smem constant byte address 0x4 - core index']
  #allocation1 [shape = 'u32[144,128]{1,0:T(1,128)}', space=vmem, size = 0x12000, scoped, tag = 'internal scratch']
  #allocation2 [shape = 'f32[16,32]{1,0:T(8,128)}', space=vmem, size = 0x2000, scoped, tag = 'scratch operand']
  #allocation3 [shape = 's32[1]{0}', space=sflag, size = 0x4, scoped, tag = 'scratch operand']
  #allocation4 [shape = 's32[1]{0}', space=sflag, size = 0x4, scoped, tag = 'scoped memory for tpu_custom_call.1']
  #allocation5 [shape = 'u8[512]{0}', space=smem, size = 0x200, scoped, tag = 'prefetched SMEM operand 0']
  #allocation8 [shape = 's32[]', space=sflag, size = 0x4, offset = 0, fixed_abs, tag = 'sflag constant byte address 0x0 - dummy sync flag']
  %s0 = inlined_call_operand.vmem [shape: s32[16], index: 0, kind: input, shape index: {}]
  %s1 = inlined_call_operand.vmem [shape: f32[128,32], index: 1, kind: input, shape index: {}]
  %s2 = inlined_call_operand.vmem [shape: bf16[32,128], index: 2, kind: input, shape index: {}]
  %s3 = inlined_call_operand.vmem [shape: f32[1,128], index: 3, kind: input, shape index: {}]
  %s4 = inlined_call_operand.hbm [shape: bf16[16,128], index: 4, kind: output, shape index: {}]
  %s5 = sld [smem:[#allocation0]]
  $region62: #{tpu_custom_call.1} parent=0
    _
  %s7 = ssub.s32 1, %s5
  %s8 = scalar_select 0, %s7, %s5
  %s9 = sshll.u32 %s0, 4
  %s10 = int_to_ptr.vmem [resolvable:$true] %s9
  %12 = dma.vmem_to_smem %s10, 16, [#allocation5], [#allocation4]
  %13 = dma.done [#allocation4], 16
  %14 = sfence
  $region1: #{tpu_custom_call.1} parent=0
    #allocation6 [shape = 'u8[4096]{0}', space=vmem, size = 0x1000, scoped, tag = 'output window, operand 0, single buffered']
    #allocation7 [shape = 's32[1]{0}', space=sflag, size = 0x4, scoped, tag = 'scoped memory for tpu_custom_call.1']
    %15 = vsyncpa [#allocation7], 0
    // Predicated region
    $region2: #{tpu_custom_call.1} parent=1 // pred_check
      _
    $region3: #{tpu_custom_call.1} parent=1 // pred_check_branch
      %17 = sbr.rel (0) target = $region5
    $region4: #{tpu_custom_call.1} parent=1 // pred_region
      _
    $region5: #{tpu_custom_call.1} parent=1 // pred_fallthru
      _
    // Predicated region
    $region6: #{tpu_custom_call.1} parent=1 // pred_check
      _
    $region7: #{tpu_custom_call.1} parent=1 // pred_check_branch
      %19 = sbr.rel (0) target = $region9
    $region8: #{tpu_custom_call.1} parent=1 // pred_region
      _
    $region9: #{tpu_custom_call.1} parent=1 // pred_fallthru
      _
    %s21 = smul.u32 0, 16
    loop: start=0, step=1, limit=16
    $region10: #{tpu_custom_call.1} parent=1 // loop_pre_header
      _
    $region11: #{tpu_custom_call.1} parent=1 // loop_header
      %s23 = sphi 0, %s27
      %p24 = scmp.ge.s32.totalorder %s23, 16
    $region12: #{tpu_custom_call.1} parent=1 // loop_header_branch
      %26 = sbr.rel (%p24) target = $region16
    $region13: #{tpu_custom_call.1} parent=1 // loop_body
      %s28 = sadd.s32 %s21, %s23
      %s29 = sld [smem:[#allocation5 + %s28]]
      %s30 = scalar_lea.vmem %s1, %s29
      %s31 = scalar_lea.vmem [#allocation2], %s23
      %p33 = scmp.lt.u32.totalorder 1, 8
      %p34 = pneg %p33
      // Predicated region
      $region17: #{tpu_custom_call.1} parent=13 // pred_check
        _
      $region18: #{tpu_custom_call.1} parent=13 // pred_check_branch
        %36 = sbr.rel (%p33) target = $region20
      $region19: #{tpu_custom_call.1} parent=13 // pred_region
        %s51 = sand.u32 1, 7
        %p52 = scmp.eq.s32.totalorder %s51, 0
        %p53 = pneg %p52
        // Predicated region
        $region32: #{tpu_custom_call.1} parent=19 // pred_check
          _
        $region33: #{tpu_custom_call.1} parent=19 // pred_check_branch
          %55 = sbr.rel (%p52) target = $region35
        $region34: #{tpu_custom_call.1} parent=19 // pred_region
          %s56 = sand.u32 1, 7
          %s57 = ssub.s32 1, %s56
          %s58 = scalar_lea.vmem %s30, %s57
          %s59 = ssub.s32 1, %s56
          %s60 = scalar_lea.vmem %s31, %s59 [#allocation2]
          %s61 = sshllo.u32 0, %s56
          loop: start=0, step=1, limit=1
          $region36: #{tpu_custom_call.1} parent=34 // loop_pre_header
            _
          $region37: #{tpu_custom_call.1} parent=34 // loop_header
            %s63 = sphi 0, %s67
            %p64 = scmp.ge.s32.totalorder %s63, 1
            %s68 = sphi %s58, %s58
            %s69 = sphi %s60, %s60
          $region38: #{tpu_custom_call.1} parent=34 // loop_header_branch
            %66 = sbr.rel (%p64) target = $region42
          $region39: #{tpu_custom_call.1} parent=34 // loop_body
            %v70 = vld [vmem:[%s68] sm:%s61]
            %71 = vst [vmem:[%s69] sm:%s61] %v70
          $region40: #{tpu_custom_call.1} parent=34 // loop_footer
            %s67 = sadd.s32 1, %s63
          $region41: #{tpu_custom_call.1} parent=34 // loop_footer_branch
            %62 = sbr.rel target = $region37
          $region42: #{tpu_custom_call.1} parent=34 // loop_exit
            _
        $region35: #{tpu_custom_call.1} parent=19 // pred_fallthru
          _
      $region20: #{tpu_custom_call.1} parent=13 // pred_fallthru
        _
      // Predicated region
      $region21: #{tpu_custom_call.1} parent=13 // pred_check
        %p37 = pneg %p33
      $region22: #{tpu_custom_call.1} parent=13 // pred_check_branch
        %39 = sbr.rel (%p37) target = $region24
      $region23: #{tpu_custom_call.1} parent=13 // pred_region
        %s40 = sshllo.u32 0, 1
        loop: start=0, step=1, limit=1
        $region25: #{tpu_custom_call.1} parent=23 // loop_pre_header
          _
        $region26: #{tpu_custom_call.1} parent=23 // loop_header
          %s42 = sphi 0, %s46
          %p43 = scmp.ge.s32.totalorder %s42, 1
          %s47 = sphi %s30, %s30
          %s48 = sphi %s31, %s31
        $region27: #{tpu_custom_call.1} parent=23 // loop_header_branch
          %45 = sbr.rel (%p43) target = $region31
        $region28: #{tpu_custom_call.1} parent=23 // loop_body
          %v49 = vld [vmem:[%s47] sm:%s40]
          %50 = vst [vmem:[%s48] sm:%s40] %v49
        $region29: #{tpu_custom_call.1} parent=23 // loop_footer
          %s46 = sadd.s32 1, %s42
        $region30: #{tpu_custom_call.1} parent=23 // loop_footer_branch
          %41 = sbr.rel target = $region26
        $region31: #{tpu_custom_call.1} parent=23 // loop_exit
          _
      $region24: #{tpu_custom_call.1} parent=13 // pred_fallthru
        _
      // Predicated region
      $region43: #{tpu_custom_call.1} parent=13 // pred_check
        _
      $region44: #{tpu_custom_call.1} parent=13 // pred_check_branch
        %74 = sbr.rel (0) target = $region46
      $region45: #{tpu_custom_call.1} parent=13 // pred_region
        %75 = vsyncadd [#allocation3], 16
      $region46: #{tpu_custom_call.1} parent=13 // pred_fallthru
        _
    $region14: #{tpu_custom_call.1} parent=1 // loop_footer
      %s27 = sadd.s32 1, %s23
    $region15: #{tpu_custom_call.1} parent=1 // loop_footer_branch
      %22 = sbr.rel target = $region11
    $region16: #{tpu_custom_call.1} parent=1 // loop_exit
      _
    loop: start=0, step=1, limit=16
    $region47: #{tpu_custom_call.1} parent=1 // loop_pre_header
      _
    $region48: #{tpu_custom_call.1} parent=1 // loop_header
      %s77 = sphi 0, %s81
      %p78 = scmp.ge.s32.totalorder %s77, 16
    $region49: #{tpu_custom_call.1} parent=1 // loop_header_branch
      %80 = sbr.rel (%p78) target = $region53
    $region50: #{tpu_custom_call.1} parent=1 // loop_body
      %s82 = smul.u32 1, 1
      %s83 = sshll.u32 %s82, 4
      %84 = dma.done [#allocation3], %s83
    $region51: #{tpu_custom_call.1} parent=1 // loop_footer
      %s81 = sadd.s32 1, %s77
    $region52: #{tpu_custom_call.1} parent=1 // loop_footer_branch
      %76 = sbr.rel target = $region48
    $region53: #{tpu_custom_call.1} parent=1 // loop_exit
      _
    %v85 = vld [vmem:[#allocation2] sm:$0xff]
    %v86 = vld [vmem:[#allocation2 + $0x8] sm:$0xff]
    %v87 = vpack.c.bf16 %v86, %v85
    %v88 = vld [vmem:[%s2] sm:$0xf]
    %v89 = vld [vmem:[%s2 + $0x4] sm:$0xf]
    %v90 = vld [vmem:[%s2 + $0x8] sm:$0xf]
    %v91 = vld [vmem:[%s2 + $0xc] sm:$0xf]
    %v92 = vld [vmem:[%s3] sm:$0x1]
    %v94 = vlaneseq
    %v95 = vshrl.u32 %v94, 7
    %v96 = vsub.s32 0, %v95
    %v97 = vrot.slane %v92, %v96
    %v103 = vunpack.c.l.b16 %v88
    %v104 = vunpack.c.l.b16 %v89
    %v105 = vunpack.c.l.b16 %v90
    %v106 = vunpack.c.l.b16 %v91
    %v107 = vpack.c.b16 %v104, %v103
    %v108 = vpack.c.b16 %v106, %v105
    %vm111 = vcmask 261120
    %v113 = vsel %vm111, %v87, 0
    %115 = vmatprep.subr.bf16.mxu0 0
    %116 = vmatpush1.bf16.msra.mxu0 %v107
    %117 = vmatprep.subr.bf16.mxu0 0
    %118 = vmatpush1.bf16.msra.mxu0 %v108
    %119 = vmatprep.subr.bf16.mxu0 0
    %120 = vmatpush1.bf16.msra.mxu0 0
    %121 = vmatprep.subr.bf16.mxu0 0
    %122 = vmatpush1.bf16.msra.mxu0 0
    %123 = vmatprep.subr.bf16.mxu0 0
    %124 = vmatpush1.bf16.msra.mxu0 0
    %125 = vmatprep.subr.bf16.mxu0 0
    %126 = vmatpush1.bf16.msra.mxu0 0
    %127 = vmatprep.subr.bf16.mxu0 0
    %128 = vmatpush1.bf16.msra.mxu0 0
    %129 = vmatprep.subr.bf16.mxu0 0
    %130 = vmatpush1.bf16.msra.mxu0 0
    %131 = vmatprep.subr.bf16.mxu0 0
    %132 = vmatpush1.bf16.msra.mxu0 0
    %133 = vmatprep.subr.bf16.mxu0 0
    %134 = vmatpush1.bf16.msra.mxu0 0
    %135 = vmatprep.subr.bf16.mxu0 0
    %136 = vmatpush1.bf16.msra.mxu0 0
    %137 = vmatprep.subr.bf16.mxu0 0
    %138 = vmatpush1.bf16.msra.mxu0 0
    %139 = vmatprep.subr.bf16.mxu0 0
    %140 = vmatpush1.bf16.msra.mxu0 0
    %141 = vmatprep.subr.bf16.mxu0 0
    %142 = vmatpush1.bf16.msra.mxu0 0
    %143 = vmatprep.subr.bf16.mxu0 0
    %144 = vmatpush1.bf16.msra.mxu0 0
    %145 = vmatprep.subr.bf16.mxu0 0
    %146 = vmatpush1.bf16.msra.mxu0 0
    %147 = vmatprep.mubr.bf16.mxu0 0
    %148 = vmatmul.mubr.bf16.gmra.mrb[0].mxu0 %v113
    %v149 = vpop.f32.mrb[0].mxu0
    %v150 = vadd.f32 %v97, %v149
    %v151 = vpop.f32.mrb[0].mxu0
    %v152 = vpop.f32.mrb[0].mxu0
    %v153 = vadd.f32 %v97, %v152
    %v154 = vpop.f32.mrb[0].mxu0
    %155 = vdwg.mxu0
    %v156 = vpack.c.bf16 %v153, %v150
    %v158 = vunpack.c.l.b16 %v156
    %v159 = vunpack.c.h.b16 %v156
    %v160 = vpack.c.b16 %v158, %v158
    %v161 = vpack.c.b16 %v159, %v159
    %164 = vst [vmem:[#allocation6] sm:$0xf] %v160
    %165 = vst [vmem:[#allocation6 + $0x4] sm:$0xf] %v161
    // Predicated region
    $region54: #{tpu_custom_call.1} parent=1 // pred_check
      _
    $region55: #{tpu_custom_call.1} parent=1 // pred_check_branch
      %167 = sbr.rel (0) target = $region57
    $region56: #{tpu_custom_call.1} parent=1 // pred_region
      %s169 = ssub.s32 128, 128
      %170 = vsyncadd [#allocation7], %s169
      %s171 = sshll.u32 [#allocation6], 4
      %s172 = int_to_ptr.vmem [resolvable:$true] %s171
      %177 = dma.vmem_to_hbm [thread:$0]  %s172, 128, %s4, [#allocation7], 64, 64, 4
    $region57: #{tpu_custom_call.1} parent=1 // pred_fallthru
      _
    // Predicated region
    $region58: #{tpu_custom_call.1} parent=1 // pred_check
      _
    $region59: #{tpu_custom_call.1} parent=1 // pred_check_branch
      %179 = sbr.rel (0) target = $region61
    $region60: #{tpu_custom_call.1} parent=1 // pred_region
      %180 = dma.done [#allocation7], 128
    $region61: #{tpu_custom_call.1} parent=1 // pred_fallthru
      _
    %181 = vsyncpa [#allocation7], 1
  %182 = vsyncmov [#allocation3]
  %s183 = vpop.sfrf %182
  %p184 = scmp.eq.s32.totalorder %s183, 0
  %p185 = pneg %p184
  %187 = shalt.err (%p185)

</llo_original>
